<compile_context>
chip_gen: v6e
topology: v6e:2x2x1
jax: 0.10.0
libtpu: 0.0.40
codegen_flags: <defaults>
</compile_context>

<pallas_src>
import functools

import jax
import jax.numpy as jnp
import numpy as np
from jax.experimental import pallas as pl
from jax.experimental.pallas import tpu as pltpu

_NEG_BIG = -1e30  # finite "-inf" so alpha = exp(m_prev - m_new) never hits nan


def _ntxent_kernel(n_real, half, t_ref, q_ref, k_ref, out_ref, m_sc, l_sc, p_sc):
    """One (row-strip i, column-tile j) step.

    t_ref  : (1, 1)    f32 in SMEM  -- exp(temperature_log) = 1 / temperature
    q_ref  : (TM, Dp)  f32/bf16     -- query rows of this strip (resident across j)
    k_ref  : (TN, Dp)  f32/bf16     -- key rows of this column tile
    out_ref: (1, TM)   f32          -- per-row loss (lane-dense), written at last j
    m/l/p  : (1, TM)   f32 scratch  -- online row-max, sum-exp, positive logit
    """
    i = pl.program_id(0)
    j = pl.program_id(1)
    tm = q_ref.shape[0]
    tn = k_ref.shape[0]
    r0 = i * tm
    c0 = j * tn

    @pl.when(j == 0)
    def _init():
        m_sc[...] = jnp.full_like(m_sc, _NEG_BIG)
        l_sc[...] = jnp.zeros_like(l_sc)
        p_sc[...] = jnp.zeros_like(p_sc)

    t = t_ref[0, 0]
    # Fold the temperature into the (TM, Dp) query operand (O(TM*D) VPU work), then
    # cast to the storage dtype (bf16 on v6e/v7x) so the matmul runs natively.
    qt = (q_ref[...].astype(jnp.float32) * t).astype(k_ref.dtype)

    # simT[c, r] = t * <zn[r0 + r], zn[c0 + c]>  (transposed so row-reductions are
    # sublane reductions and the accumulators / output stay lane-dense).
    simT = jax.lax.dot_general(
        k_ref[...], qt, (((1,), (1,)), ((), ())),
        preferred_element_type=jnp.float32)                       # (TN, TM)

    key_ids = jax.lax.broadcasted_iota(jnp.int32, (tn, 1), 0) + c0   # global column
    qry_ids = jax.lax.broadcasted_iota(jnp.int32, (1, tm), 1) + r0   # global row
    pos_col = jnp.where(qry_ids < half, qry_ids + half, qry_ids - half)

    # Positive logit extracted straight from the MXU result (no rolled-partner input).
    is_pos = key_ids == pos_col
    p_sc[...] += jnp.sum(jnp.where(is_pos, simT, 0.0), axis=0, keepdims=True)

    # Online logsumexp over every non-diagonal real column (positive + all negatives);
    # padded rows/columns (>= n_real) are excluded here and dropped in the wrapper.
    valid = jnp.logical_and(key_ids != qry_ids, key_ids < n_real)
    tile_max = jnp.max(jnp.where(valid, simT, _NEG_BIG), axis=0, keepdims=True)
    m_prev = m_sc[...]
    m_new = jnp.maximum(m_prev, tile_max)
    alpha = jnp.exp(m_prev - m_new)
    exps = jnp.where(valid, jnp.exp(simT - m_new), 0.0)
    l_sc[...] = alpha * l_sc[...] + jnp.sum(exps, axis=0, keepdims=True)
    m_sc[...] = m_new

    @pl.when(j == pl.num_programs(1) - 1)
    def _finalize():
        # cross_entropy([pos | negs], 0) per row == logsumexp_{c != r} sim[r, c] - pos
        # (the reference's row-max shift cancels analytically).
        out_ref[...] = jnp.log(l_sc[...]) + m_sc[...] - p_sc[...]


def _round_up(x, m):
    return ((x + m - 1) // m) * m


def _default_block_rows():
    # v7x: 64 MiB VMEM per TensorCore -> smaller default row strip; v5e/v6e: 256.
    try:
        if pltpu.get_tpu_info().vmem_capacity_bytes <= 64 * 1024 * 1024:
            return 128
    except Exception:
        pass
    return 256


def _block_spec(block_shape, index_map, single_buffer):
    """BlockSpec; request a single pipeline buffer when the block is grid-invariant."""
    if single_buffer:
        try:
            return pl.BlockSpec(block_shape, index_map, pipeline_mode=pl.Buffered(1))
        except (TypeError, AttributeError):
            pass  # older jax without pipeline_mode: fall back to default buffering
    return pl.BlockSpec(block_shape, index_map)


@functools.partial(jax.jit, static_argnums=(3, 4))
def _ntxent_impl(z_i, z_j, temperature_exp, block_rows, use_bf16_matmul):
    z = jnp.concatenate([z_i, z_j], axis=0).astype(jnp.float32)     # (N, D)
    n_real, d = z.shape
    half = n_real // 2

    # L2-normalize rows once (F.normalize, eps=1e-12), rsqrt form.
    sumsq = jnp.sum(z * z, axis=1, keepdims=True)
    zn = z * jax.lax.rsqrt(jnp.maximum(sumsq, 1e-24))

    # Pad the feature dim to a lane multiple so loads and the MXU K dim are dense.
    d_pad = _round_up(max(d, 128), 128)
    if d_pad != d:
        zn = jnp.pad(zn, ((0, 0), (0, d_pad - d)))

    # Row strip: a multiple of 128 when tiling (lane-dense (1, TM) output blocks),
    # otherwise one strip covering the (sublane-rounded) batch.  Pad rows to TM; the
    # kernel masks padded columns out of the logsumexp and the wrapper drops padded
    # rows, so padding never changes the loss.
    if n_real <= block_rows:
        tm = _round_up(n_real, 16 if use_bf16_matmul else 8)
    else:
        tm = block_rows
    n_pad = _round_up(n_real, tm)
    if n_pad != n_real:
        zn = jnp.pad(zn, ((0, n_pad - n_real), (0, 0)))

    # bf16 MXU operands (v6e/v7x native) are cast ONCE here: halves key VMEM/HBM and
    # removes the per-step O(N*Dp) cast.  Elementwise math stays f32 inside the kernel.
    esz = 2 if use_bf16_matmul else 4
    if use_bf16_matmul:
        zn = zn.astype(jnp.bfloat16)

    # Column tiling: keep the whole key matrix resident when it (plus the (TN, TM)
    # strip temporaries) fits a conservative live-VMEM target; otherwise go flash-style
    # with TN = TM column tiles and online-softmax accumulators.
    def live_vmem(tn, k_bufs):
        return (k_bufs * tn * d_pad * esz          # key buffers
                + 2 * tm * d_pad * esz             # query double-buffer
                + 5 * tm * tn * 4                  # simT / exp / mask temporaries
                + 2 * tm * 4 + 3 * tm * 4)         # out blocks + accumulator scratch

    target = 28 * 1024 * 1024
    tn = n_pad if live_vmem(n_pad, 1) <= target else tm
    grid = (n_pad // tm, n_pad // tn)
    k_bufs = 1 if grid[1] == 1 else 2
    vmem_limit = int(min(max(1.25 * live_vmem(tn, k_bufs) + (2 << 20), 16 << 20),
                         48 << 20))

    t = jnp.asarray(temperature_exp, jnp.float32).reshape(1, 1)

    per_row = pl.pallas_call(
        functools.partial(_ntxent_kernel, n_real, half),
        out_shape=jax.ShapeDtypeStruct((1, n_pad), jnp.float32),
        grid=grid,
        in_specs=[
            pl.BlockSpec(memory_space=pltpu.MemorySpace.SMEM),                 # t
            _block_spec((tm, d_pad), lambda i, j: (i, 0), grid[0] == 1),       # queries
            _block_spec((tn, d_pad), lambda i, j: (j, 0), grid[1] == 1),       # keys
        ],
        out_specs=pl.BlockSpec((1, tm), lambda i, j: (0, i)),
        scratch_shapes=[pltpu.VMEM((1, tm), jnp.float32)] * 3,                 # m, l, pos
        compiler_params=pltpu.CompilerParams(
            dimension_semantics=("parallel", "arbitrary"),
            vmem_limit_bytes=vmem_limit),
    )(t, zn, zn)

    return jnp.mean(per_row[0, :n_real])


def ntxent_loss(z_i, z_j, temperature_exp, *, block_rows=None, use_bf16_matmul=False):
    """Pallas NT-Xent loss.  z_i, z_j: (B, D).  Returns scalar float32 loss."""
    if block_rows is None:
        block_rows = _default_block_rows()
    assert block_rows % 128 == 0, "block_rows must be a multiple of 128"
    return _ntxent_impl(z_i, z_j, jnp.asarray(temperature_exp, jnp.float32),
                        int(block_rows), bool(use_bf16_matmul))


def _reference_loss(z_i, z_j, temperature_exp):
    # Pure-JAX reference mirroring the PyTorch forward exactly.
    z = jnp.concatenate([z_i, z_j], axis=0).astype(jnp.float32)
    n_total = z.shape[0]
    half = n_total // 2
    z = z / jnp.maximum(jnp.linalg.norm(z, axis=1, keepdims=True), 1e-12)
    sim = z @ z.T * temperature_exp
    sim = sim - jnp.max(sim, axis=1, keepdims=True)
    rows = jnp.arange(n_total)
    pos_col = jnp.where(rows < half, rows + half, rows - half)
    positives = sim[rows, pos_col]
    diag = jnp.eye(n_total, dtype=bool)
    exps = jnp.where(diag, 0.0, jnp.exp(sim))
    lse = jnp.log(jnp.sum(exps, axis=1))
    return jnp.mean(lse - positives)


if __name__ == "__main__":
    # Deterministic module parameters (__init__): temperature = 0.5
    temperature = 0.5
    temperature_log = float(np.log(1.0 / temperature))      # nn.Parameter scalar
    temperature_exp = float(np.exp(temperature_log))         # = 1 / temperature

    batch_size, hidden = 4, 32
    key = jax.random.PRNGKey(0)
    k1, k2 = jax.random.split(key)
    z_i = jax.random.normal(k1, (batch_size, hidden), dtype=jnp.float32)
    z_j = jax.random.normal(k2, (batch_size, hidden), dtype=jnp.float32)

    ref = _reference_loss(z_i, z_j, temperature_exp)

    # f32 MXU operands: must match the PyTorch-equivalent reference to 1e-5.
    loss = jax.block_until_ready(ntxent_loss(z_i, z_j, temperature_exp))
    assert np.allclose(np.asarray(loss), np.asarray(ref), rtol=1e-5, atol=1e-5), (loss, ref)

    # bf16 MXU operands (native v6e/v7x path): loose tolerance, also exercises padding.
    loss_bf16 = jax.block_until_ready(
        ntxent_loss(z_i, z_j, temperature_exp, use_bf16_matmul=True))
    assert np.isfinite(np.asarray(loss_bf16))
    assert np.allclose(np.asarray(loss_bf16), np.asarray(ref), rtol=0.0, atol=1e-1), (
        loss_bf16, ref)

    print("KERNEL_OK")
</pallas_src>

<mosaic_0001>
module attributes {stable_mosaic.version = 11 : i64} {
  func.func @_ntxent_kernel(%arg0: i32, %arg1: i32, %arg2: memref<1x1xf32, #tpu.memory_space<smem>>, %arg3: memref<8x128xf32, #tpu.memory_space<vmem>>, %arg4: memref<8x128xf32, #tpu.memory_space<vmem>>, %arg5: memref<1x8xf32, #tpu.memory_space<vmem>>, %arg6: memref<1x8xf32, #tpu.memory_space<vmem>>, %arg7: memref<1x8xf32, #tpu.memory_space<vmem>>, %arg8: memref<1x8xf32, #tpu.memory_space<vmem>>) attributes {dimension_semantics = [#tpu.dimension_semantics<parallel>, #tpu.dimension_semantics<arbitrary>], iteration_bounds = array<i64: 1, 1>, scalar_prefetch = 0 : i64, scratch_operands = 3 : i64, tpu.core_type = #tpu.core_type<tc>, window_params = [{transform_indices = @transform_0, window_bounds = array<i64: 1, 1>}, {pipeline_mode = #tpu.pipeline_mode<synchronous>, transform_indices = @transform_1, window_bounds = array<i64: 8, 128>}, {pipeline_mode = #tpu.pipeline_mode<synchronous>, transform_indices = @transform_2, window_bounds = array<i64: 8, 128>}, {transform_indices = @transform_3, window_bounds = array<i64: 1, 8>}]} {
    %c8_i32 = arith.constant 8 : i32
    %0 = arith.muli %arg0, %c8_i32 : i32
    %c8_i32_0 = arith.constant 8 : i32
    %1 = arith.muli %arg1, %c8_i32_0 : i32
    %c0_i32 = arith.constant 0 : i32
    %2 = arith.cmpi eq, %arg1, %c0_i32 : i32
    %3 = arith.extui %2 : i1 to i32
    %c0_i32_1 = arith.constant 0 : i32
    %4 = arith.cmpi ne, %3, %c0_i32_1 : i32
    scf.if %4 {
      %cst_30 = arith.constant -1.000000e+30 : f32
      %64 = vector.broadcast %cst_30 : f32 to vector<1x8xf32>
      %c0_31 = arith.constant 0 : index
      %c0_32 = arith.constant 0 : index
      %65 = vector.load %arg6[%c0_31, %c0_32] : memref<1x8xf32, #tpu.memory_space<vmem>>, vector<1x8xf32>
      tpu.vector_store %arg6[%c0_31, %c0_32], %64 {strides = array<i32>} : memref<1x8xf32, #tpu.memory_space<vmem>>, vector<1x8xf32>,
      %cst_33 = arith.constant 0.000000e+00 : f32
      %66 = vector.broadcast %cst_33 : f32 to vector<1x8xf32>
      %c0_34 = arith.constant 0 : index
      %c0_35 = arith.constant 0 : index
      %67 = vector.load %arg7[%c0_34, %c0_35] : memref<1x8xf32, #tpu.memory_space<vmem>>, vector<1x8xf32>
      tpu.vector_store %arg7[%c0_34, %c0_35], %66 {strides = array<i32>} : memref<1x8xf32, #tpu.memory_space<vmem>>, vector<1x8xf32>,
      %cst_36 = arith.constant 0.000000e+00 : f32
      %68 = vector.broadcast %cst_36 : f32 to vector<1x8xf32>
      %c0_37 = arith.constant 0 : index
      %c0_38 = arith.constant 0 : index
      %69 = vector.load %arg8[%c0_37, %c0_38] : memref<1x8xf32, #tpu.memory_space<vmem>>, vector<1x8xf32>
      tpu.vector_store %arg8[%c0_37, %c0_38], %68 {strides = array<i32>} : memref<1x8xf32, #tpu.memory_space<vmem>>, vector<1x8xf32>,
    } else {
    }
    %c0 = arith.constant 0 : index
    %c0_2 = arith.constant 0 : index
    %5 = memref.load %arg2[%c0, %c0_2] : memref<1x1xf32, #tpu.memory_space<smem>>
    %c0_3 = arith.constant 0 : index
    %c0_4 = arith.constant 0 : index
    %6 = vector.load %arg3[%c0_3, %c0_4] : memref<8x128xf32, #tpu.memory_space<vmem>>, vector<8x128xf32>
    %7 = vector.broadcast %5 : f32 to vector<8x128xf32>
    %8 = arith.mulf %6, %7 : vector<8x128xf32>
    %c0_5 = arith.constant 0 : index
    %c0_6 = arith.constant 0 : index
    %9 = vector.load %arg4[%c0_5, %c0_6] : memref<8x128xf32, #tpu.memory_space<vmem>>, vector<8x128xf32>
    %cst = arith.constant dense<0.000000e+00> : vector<8x8xf32>
    %10 = tpu.matmul %9, %8, %cst {dimension_numbers = #tpu.dot_dimension_numbers<[1], [1], [0], [0], [0, 0, 1, 0], [], []>} : vector<8x128xf32>, vector<8x128xf32>, vector<8x8xf32> -> vector<8x8xf32>
    %11 = tpu.iota {dimensions = array<i32: 0>} : vector<8x1xi32>
    %12 = vector.broadcast %1 : i32 to vector<8x1xi32>
    %13 = arith.addi %11, %12 : vector<8x1xi32>
    %14 = tpu.iota {dimensions = array<i32: 1>} : vector<1x8xi32>
    %15 = vector.broadcast %0 : i32 to vector<1x8xi32>
    %16 = arith.addi %14, %15 : vector<1x8xi32>
    %c4_i32 = arith.constant 4 : i32
    %17 = vector.broadcast %c4_i32 : i32 to vector<1x8xi32>
    %18 = arith.cmpi slt, %16, %17 : vector<1x8xi32>
    %c4_i32_7 = arith.constant 4 : i32
    %19 = vector.broadcast %c4_i32_7 : i32 to vector<1x8xi32>
    %20 = arith.addi %16, %19 : vector<1x8xi32>
    %c4_i32_8 = arith.constant 4 : i32
    %21 = vector.broadcast %c4_i32_8 : i32 to vector<1x8xi32>
    %22 = arith.subi %16, %21 : vector<1x8xi32>
    %23 = arith.select %18, %20, %22 : vector<1x8xi1>, vector<1x8xi32>
    %24 = vector.broadcast %13 : vector<8x1xi32> to vector<8x8xi32>
    %25 = vector.broadcast %23 : vector<1x8xi32> to vector<8x8xi32>
    %26 = arith.cmpi eq, %24, %25 : vector<8x8xi32>
    %c0_9 = arith.constant 0 : index
    %c0_10 = arith.constant 0 : index
    %27 = vector.load %arg8[%c0_9, %c0_10] : memref<1x8xf32, #tpu.memory_space<vmem>>, vector<1x8xf32>
    %cst_11 = arith.constant 0.000000e+00 : f32
    %28 = vector.broadcast %cst_11 : f32 to vector<8x8xf32>
    %29 = arith.select %26, %10, %28 : vector<8x8xi1>, vector<8x8xf32>
    %cst_12 = arith.constant dense<0.000000e+00> : vector<8xf32>
    %30 = vector.multi_reduction <add>, %29, %cst_12 [0] : vector<8x8xf32> to vector<8xf32>
    %31 = vector.shape_cast %30 : vector<8xf32> to vector<1x8xf32>
    %32 = arith.addf %27, %31 : vector<1x8xf32>
    %c0_13 = arith.constant 0 : index
    %c0_14 = arith.constant 0 : index
    %33 = vector.load %arg8[%c0_13, %c0_14] : memref<1x8xf32, #tpu.memory_space<vmem>>, vector<1x8xf32>
    tpu.vector_store %arg8[%c0_13, %c0_14], %32 {strides = array<i32>} : memref<1x8xf32, #tpu.memory_space<vmem>>, vector<1x8xf32>,
    %34 = vector.broadcast %13 : vector<8x1xi32> to vector<8x8xi32>
    %35 = vector.broadcast %16 : vector<1x8xi32> to vector<8x8xi32>
    %36 = arith.cmpi ne, %34, %35 : vector<8x8xi32>
    %c8_i32_15 = arith.constant 8 : i32
    %37 = vector.broadcast %c8_i32_15 : i32 to vector<8x1xi32>
    %38 = arith.cmpi slt, %13, %37 : vector<8x1xi32>
    %39 = vector.broadcast %38 : vector<8x1xi1> to vector<8x8xi1>
    %40 = arith.andi %36, %39 : vector<8x8xi1>
    %cst_16 = arith.constant -1.000000e+30 : f32
    %41 = vector.broadcast %cst_16 : f32 to vector<8x8xf32>
    %42 = arith.select %40, %10, %41 : vector<8x8xi1>, vector<8x8xf32>
    %cst_17 = arith.constant dense<0xFF800000> : vector<8xf32>
    %43 = vector.multi_reduction <maximumf>, %42, %cst_17 [0] : vector<8x8xf32> to vector<8xf32>
    %44 = vector.shape_cast %43 : vector<8xf32> to vector<1x8xf32>
    %c0_18 = arith.constant 0 : index
    %c0_19 = arith.constant 0 : index
    %45 = vector.load %arg6[%c0_18, %c0_19] : memref<1x8xf32, #tpu.memory_space<vmem>>, vector<1x8xf32>
    %46 = arith.maximumf %45, %44 : vector<1x8xf32>
    %47 = arith.subf %45, %46 : vector<1x8xf32>
    %48 = math.exp %47 : vector<1x8xf32>
    %49 = vector.broadcast %46 : vector<1x8xf32> to vector<8x8xf32>
    %50 = arith.subf %10, %49 : vector<8x8xf32>
    %51 = math.exp %50 : vector<8x8xf32>
    %cst_20 = arith.constant 0.000000e+00 : f32
    %52 = vector.broadcast %cst_20 : f32 to vector<8x8xf32>
    %53 = arith.select %40, %51, %52 : vector<8x8xi1>, vector<8x8xf32>
    %c0_21 = arith.constant 0 : index
    %c0_22 = arith.constant 0 : index
    %54 = vector.load %arg7[%c0_21, %c0_22] : memref<1x8xf32, #tpu.memory_space<vmem>>, vector<1x8xf32>
    %55 = arith.mulf %48, %54 : vector<1x8xf32>
    %cst_23 = arith.constant dense<0.000000e+00> : vector<8xf32>
    %56 = vector.multi_reduction <add>, %53, %cst_23 [0] : vector<8x8xf32> to vector<8xf32>
    %57 = vector.shape_cast %56 : vector<8xf32> to vector<1x8xf32>
    %58 = arith.addf %55, %57 : vector<1x8xf32>
    %c0_24 = arith.constant 0 : index
    %c0_25 = arith.constant 0 : index
    %59 = vector.load %arg7[%c0_24, %c0_25] : memref<1x8xf32, #tpu.memory_space<vmem>>, vector<1x8xf32>
    tpu.vector_store %arg7[%c0_24, %c0_25], %58 {strides = array<i32>} : memref<1x8xf32, #tpu.memory_space<vmem>>, vector<1x8xf32>,
    %c0_26 = arith.constant 0 : index
    %c0_27 = arith.constant 0 : index
    %60 = vector.load %arg6[%c0_26, %c0_27] : memref<1x8xf32, #tpu.memory_space<vmem>>, vector<1x8xf32>
    tpu.vector_store %arg6[%c0_26, %c0_27], %46 {strides = array<i32>} : memref<1x8xf32, #tpu.memory_space<vmem>>, vector<1x8xf32>,
    %c0_i32_28 = arith.constant 0 : i32
    %61 = arith.cmpi eq, %arg1, %c0_i32_28 : i32
    %62 = arith.extui %61 : i1 to i32
    %c0_i32_29 = arith.constant 0 : i32
    %63 = arith.cmpi ne, %62, %c0_i32_29 : i32
    scf.if %63 {
      %c0_30 = arith.constant 0 : index
      %c0_31 = arith.constant 0 : index
      %64 = vector.load %arg7[%c0_30, %c0_31] : memref<1x8xf32, #tpu.memory_space<vmem>>, vector<1x8xf32>
      %65 = math.log %64 : vector<1x8xf32>
      %c0_32 = arith.constant 0 : index
      %c0_33 = arith.constant 0 : index
      %66 = vector.load %arg6[%c0_32, %c0_33] : memref<1x8xf32, #tpu.memory_space<vmem>>, vector<1x8xf32>
      %67 = arith.addf %65, %66 : vector<1x8xf32>
      %c0_34 = arith.constant 0 : index
      %c0_35 = arith.constant 0 : index
      %68 = vector.load %arg8[%c0_34, %c0_35] : memref<1x8xf32, #tpu.memory_space<vmem>>, vector<1x8xf32>
      %69 = arith.subf %67, %68 : vector<1x8xf32>
      %c0_36 = arith.constant 0 : index
      %c0_37 = arith.constant 0 : index
      %70 = vector.load %arg5[%c0_36, %c0_37] : memref<1x8xf32, #tpu.memory_space<vmem>>, vector<1x8xf32>
      tpu.vector_store %arg5[%c0_36, %c0_37], %69 {strides = array<i32>} : memref<1x8xf32, #tpu.memory_space<vmem>>, vector<1x8xf32>,
    } else {
    }
    return
  }
  func.func @transform_0(%arg0: i32, %arg1: i32) -> (i32, i32) {
    %c0_i32 = arith.constant 0 : i32
    %c0_i32_0 = arith.constant 0 : i32
    %c0_i32_1 = arith.constant 0 : i32
    return %c0_i32, %c0_i32_0 : i32, i32
  }
  func.func @transform_1(%arg0: i32, %arg1: i32) -> (i32, i32) {
    %c0_i32 = arith.constant 0 : i32
    %c0_i32_0 = arith.constant 0 : i32
    return %arg0, %c0_i32 : i32, i32
  }
  func.func @transform_2(%arg0: i32, %arg1: i32) -> (i32, i32) {
    %c0_i32 = arith.constant 0 : i32
    %c0_i32_0 = arith.constant 0 : i32
    return %arg1, %c0_i32 : i32, i32
  }
  func.func @transform_3(%arg0: i32, %arg1: i32) -> (i32, i32) {
    %c0_i32 = arith.constant 0 : i32
    %c0_i32_0 = arith.constant 0 : i32
    return %c0_i32, %arg0 : i32, i32
  }
}

</mosaic_0001>

<llo_original>
// kernel: _ntxent_impl.1
$region0: #{_ntxent_impl.1}
  #allocation0 [shape = 'u32[]', space=smem, size = 0x4, offset = 0x4, fixed_abs, tag = 'smem constant byte address 0x4 - core index']
  #allocation1 [shape = 'u32[144,128]{1,0:T(1,128)}', space=vmem, size = 0x12000, scoped, tag = 'internal scratch']
  #allocation2 [shape = 'f32[1,8]{1,0:T(1,128)}', space=vmem, size = 0x200, scoped, tag = 'scratch operand']
  #allocation3 [shape = 'f32[1,8]{1,0:T(1,128)}', space=vmem, size = 0x200, scoped, tag = 'scratch operand']
  #allocation4 [shape = 'f32[1,8]{1,0:T(1,128)}', space=vmem, size = 0x200, scoped, tag = 'scratch operand']
  #allocation5 [shape = 'f32[1,1]{1,0:T(1,128)S(6)}', space=smem, size = 0x200, scoped, tag = 'scoped memory for _ntxent_impl.1']
  %s0 = inlined_call_operand.<no memory space> [shape: f32[1,1], index: 0, kind: input, shape index: {}]
  %s1 = inlined_call_operand.vmem [shape: f32[8,128], index: 1, kind: input, shape index: {}, may-alias: {1,2}]
  %s2 = inlined_call_operand.vmem [shape: f32[8,128], index: 2, kind: input, shape index: {}, may-alias: {1,2}]
  %s3 = inlined_call_operand.vmem [shape: f32[1,8], index: 3, kind: output, shape index: {}]
  %s4 = sld [smem:[#allocation0]]
  $region30: #{_ntxent_impl.1} parent=0
    _
  %s6 = ssub.s32 1, %s4
  %s7 = scalar_select 0, %s6, %s4
  %8 = sst [smem:[#allocation5]] %s0
  // Predicated region
  $region2: #{_ntxent_impl.1} parent=0 // pred_check
    _
  $region3: #{_ntxent_impl.1} parent=0 // pred_check_branch
    %10 = sbr.rel (0) target = $region5
  $region4: #{_ntxent_impl.1} parent=0 // pred_region
    _
  $region5: #{_ntxent_impl.1} parent=0 // pred_fallthru
    _
  // Predicated region
  $region6: #{_ntxent_impl.1} parent=0 // pred_check
    _
  $region7: #{_ntxent_impl.1} parent=0 // pred_check_branch
    %12 = sbr.rel (0) target = $region9
  $region8: #{_ntxent_impl.1} parent=0 // pred_region
    _
  $region9: #{_ntxent_impl.1} parent=0 // pred_fallthru
    _
  // Predicated region
  $region10: #{_ntxent_impl.1} parent=0 // pred_check
    _
  $region11: #{_ntxent_impl.1} parent=0 // pred_check_branch
    %14 = sbr.rel (0) target = $region13
  $region12: #{_ntxent_impl.1} parent=0 // pred_region
    _
  $region13: #{_ntxent_impl.1} parent=0 // pred_fallthru
    _
  %s15 = smul.u32 0, 8
  %s16 = smul.u32 0, 8
  %p17 = scmp.eq.s32.totalorder 0, 0
  // Predicated region
  $region14: #{_ntxent_impl.1} parent=0 // pred_check
    %p18 = pneg %p17
  $region15: #{_ntxent_impl.1} parent=0 // pred_check_branch
    %20 = sbr.rel (%p18) target = $region17
  $region16: #{_ntxent_impl.1} parent=0 // pred_region
    %vm21 = vcmask 57344
    %22 = vst.msk [vmem:[#allocation2] sm:$0x1] %vm21, -1e+30
    %23 = vst.msk [vmem:[#allocation3] sm:$0x1] %vm21, 0.0
    %24 = vst.msk [vmem:[#allocation4] sm:$0x1] %vm21, 0.0
  $region17: #{_ntxent_impl.1} parent=0 // pred_fallthru
    _
  %s25 = sld [smem:[#allocation5]]
  %v26 = vld [vmem:[%s1] sm:$0xff]
  %v27 = vstv %s25
  %v28 = vmul.f32 %v26, %v27
  %v29 = vld [vmem:[%s2] sm:$0xff]
  %30 = vmatprep.subr.mxu0 0.0
  %31 = vmatpush1.xpose.msra.mxu0 0.0
  %32 = vmatprep.subr.mxu0 0.0
  %33 = vmatpush1.xpose.msra.mxu0 0.0
  %34 = vmatprep.subr.mxu0 0.0
  %35 = vmatpush1.xpose.msra.mxu0 0.0
  %36 = vmatprep.subr.mxu0 0.0
  %37 = vmatpush1.xpose.msra.mxu0 0.0
  %38 = vmatprep.subr.mxu0 0.0
  %39 = vmatpush1.xpose.msra.mxu0 0.0
  %40 = vmatprep.subr.mxu0 0.0
  %41 = vmatpush1.xpose.msra.mxu0 0.0
  %42 = vmatprep.subr.mxu0 0.0
  %43 = vmatpush1.xpose.msra.mxu0 0.0
  %44 = vmatprep.subr.mxu0 0.0
  %45 = vmatpush1.xpose.msra.mxu0 0.0
  %46 = vmatprep.subr.mxu0 0.0
  %47 = vmatpush1.xpose.msra.mxu0 0.0
  %48 = vmatprep.subr.mxu0 0.0
  %49 = vmatpush1.xpose.msra.mxu0 0.0
  %50 = vmatprep.subr.mxu0 0.0
  %51 = vmatpush1.xpose.msra.mxu0 0.0
  %52 = vmatprep.subr.mxu0 0.0
  %53 = vmatpush1.xpose.msra.mxu0 0.0
  %54 = vmatprep.subr.mxu0 0.0
  %55 = vmatpush1.xpose.msra.mxu0 0.0
  %56 = vmatprep.subr.mxu0 0.0
  %57 = vmatpush1.xpose.msra.mxu0 0.0
  %58 = vmatprep.subr.mxu0 0.0
  %59 = vmatpush1.xpose.msra.mxu0 0.0
  %60 = vmatprep.subr.mxu0 0.0
  %61 = vmatpush1.xpose.msra.mxu0 %v28
  %62 = vmatprep.subr.mxu0 0.0
  %63 = vmatpush2.xpose.msra.mxu0 0.0
  %64 = vmatprep.subr.mxu0 0.0
  %65 = vmatpush2.xpose.msra.mxu0 0.0
  %66 = vmatprep.subr.mxu0 0.0
  %67 = vmatpush2.xpose.msra.mxu0 0.0
  %68 = vmatprep.subr.mxu0 0.0
  %69 = vmatpush2.xpose.msra.mxu0 0.0
  %70 = vmatprep.subr.mxu0 0.0
  %71 = vmatpush2.xpose.msra.mxu0 0.0
  %72 = vmatprep.subr.mxu0 0.0
  %73 = vmatpush2.xpose.msra.mxu0 0.0
  %74 = vmatprep.subr.mxu0 0.0
  %75 = vmatpush2.xpose.msra.mxu0 0.0
  %76 = vmatprep.subr.mxu0 0.0
  %77 = vmatpush2.xpose.msra.mxu0 0.0
  %78 = vmatprep.subr.mxu0 0.0
  %79 = vmatpush2.xpose.msra.mxu0 0.0
  %80 = vmatprep.subr.mxu0 0.0
  %81 = vmatpush2.xpose.msra.mxu0 0.0
  %82 = vmatprep.subr.mxu0 0.0
  %83 = vmatpush2.xpose.msra.mxu0 0.0
  %84 = vmatprep.subr.mxu0 0.0
  %85 = vmatpush2.xpose.msra.mxu0 0.0
  %86 = vmatprep.subr.mxu0 0.0
  %87 = vmatpush2.xpose.msra.mxu0 0.0
  %88 = vmatprep.subr.mxu0 0.0
  %89 = vmatpush2.xpose.msra.mxu0 0.0
  %90 = vmatprep.subr.mxu0 0.0
  %91 = vmatpush2.xpose.msra.mxu0 0.0
  %92 = vmatprep.subr.mxu0 0.0
  %93 = vmatpush2.xpose.msra.mxu0 0.0
  %94 = vmatprep.mubr.f32.mxu0 0.0
  %95 = vmatmul.mubr.f32.gmra.mxu0 %v29
  %v96 = vpop.f32.mrf.mxu0
  %v97 = vadd.f32 0.0, %v96
  %v98 = vpop.f32.mrf.mxu0
  %99 = vdwg.mxu0
  %v100 = vlaneseq
  %v101 = vshrl.u32 %v100, 7
  %v102 = vstv %s16
  %v103 = vadd.s32 %v101, %v102
  %v104 = vlaneseq
  %v105 = vand.u32 %v104, 127
  %v106 = vstv %s15
  %v107 = vadd.s32 %v105, %v106
  %vm108 = vcmp.lt.s32.totalorder %v107, 4
  %v109 = vadd.s32 %v107, 4
  %v110 = vsub.s32 %v107, 4
  %v111 = vsel %vm108, %v109, %v110
  %vm112 = vcmp.eq.s32.totalorder %v103, %v111
  %v113 = vld [vmem:[#allocation4] sm:$0x1]
  %v114 = vsel %vm112, %v97, 0.0
  %vm115 = vcmask 64512
  %v116 = vsel %vm115, %v114, 0.0
  %v117 = vrot.slane %v116, 4
  %v118 = vadd.f32 %v116, %v117
  %v119 = vrot.slane %v118, 2
  %v120 = vadd.f32 %v118, %v119
  %v121 = vrot.slane %v120, 1
  %v122 = vadd.f32 %v120, %v121
  %v123 = vadd.f32 %v113, %v122
  %vm124 = vcmask 57344
  %125 = vst.msk [vmem:[#allocation4] sm:$0x1] %vm124, %v123
  %vm126 = vcmp.ne.s32.totalorder %v103, %v107
  %vm127 = vcmp.lt.s32.totalorder %v103, 8
  %v128 = vsel %vm127, 1, 0
  %vm129 = vcmp.eq.s32.totalorder %v128, 1
  %vm130 = vmand %vm126, %vm129
  %v131 = vsel %vm130, %v97, -1e+30
  %v132 = vsel %vm115, %v131, -inf
  %v133 = vrot.slane %v132, 4
  %v134 = vmax.f32 %v132, %v133
  %v135 = vrot.slane %v134, 2
  %v136 = vmax.f32 %v134, %v135
  %v137 = vrot.slane %v136, 1
  %v138 = vmax.f32 %v136, %v137
  %v139 = vld [vmem:[#allocation2] sm:$0x1]
  %v140 = vmax.f32 %v139, %v138
  %v141 = vsub.f32 %v139, %v140
  %v142 = vmul.f32 %v141, 1.442695
  %v143 = vpow.pop %v142
  %v145 = vlaneseq
  %v146 = vshrl.u32 %v145, 7
  %v147 = vsub.s32 0, %v146
  %v148 = vrot.slane %v140, %v147
  %v150 = vsub.f32 %v97, %v148
  %v151 = vmul.f32 %v150, 1.442695
  %v152 = vpow.pop %v151
  %v153 = vsel %vm130, %v152, 0.0
  %v154 = vld [vmem:[#allocation3] sm:$0x1]
  %v155 = vmul.f32 %v143, %v154
  %v156 = vsel %vm115, %v153, 0.0
  %v157 = vrot.slane %v156, 4
  %v158 = vadd.f32 %v156, %v157
  %v159 = vrot.slane %v158, 2
  %v160 = vadd.f32 %v158, %v159
  %v161 = vrot.slane %v160, 1
  %v162 = vadd.f32 %v160, %v161
  %v163 = vadd.f32 %v155, %v162
  %164 = vst.msk [vmem:[#allocation3] sm:$0x1] %vm124, %v163
  %165 = vst.msk [vmem:[#allocation2] sm:$0x1] %vm124, %v140
  // Predicated region
  $region18: #{_ntxent_impl.1} parent=0 // pred_check
    %p166 = pneg %p17
  $region19: #{_ntxent_impl.1} parent=0 // pred_check_branch
    %168 = sbr.rel (%p166) target = $region21
  $region20: #{_ntxent_impl.1} parent=0 // pred_region
    %v169 = vld [vmem:[#allocation3] sm:$0x1]
    %v170 = vlog2.pop %v169
    %v171 = vmul.f32 %v170, 0.6931472
    %v172 = vld [vmem:[#allocation2] sm:$0x1]
    %v173 = vadd.f32 %v171, %v172
    %v174 = vld [vmem:[#allocation4] sm:$0x1]
    %v175 = vsub.f32 %v173, %v174
    %176 = vst.msk [vmem:[%s3] sm:$0x1] %vm124, %v175
  $region21: #{_ntxent_impl.1} parent=0 // pred_fallthru
    _
  // Predicated region
  $region22: #{_ntxent_impl.1} parent=0 // pred_check
    _
  $region23: #{_ntxent_impl.1} parent=0 // pred_check_branch
    %178 = sbr.rel (0) target = $region25
  $region24: #{_ntxent_impl.1} parent=0 // pred_region
    _
  $region25: #{_ntxent_impl.1} parent=0 // pred_fallthru
    _
  // Predicated region
  $region26: #{_ntxent_impl.1} parent=0 // pred_check
    _
  $region27: #{_ntxent_impl.1} parent=0 // pred_check_branch
    %180 = sbr.rel (0) target = $region29
  $region28: #{_ntxent_impl.1} parent=0 // pred_region
    _
  $region29: #{_ntxent_impl.1} parent=0 // pred_fallthru
    _

</llo_original>
